<compile_context>
chip_gen: v5e
topology: v5e:2x2
jax: 0.10.0
libtpu: 0.0.40
codegen_flags: <defaults>
</compile_context>

<pallas_src>
import math

import jax
import jax.numpy as jnp
from jax import lax
from jax.experimental import pallas as pl
from jax.experimental.pallas import tpu as pltpu

BN_EPS = 1e-5
NUM_BN_LAYERS = 3


def mlp_decoder_kernel(z_ref, w0_ref, b0_ref, w_ref, g_ref, be_ref,
                       wh_ref, bh_ref, mu_ref, scale_ref, h_ref):
    l = pl.program_id(0)

    # --- decoder_input (runs once, step 0): Linear + ReLU, no BN ---
    @pl.when(l == 0)
    def _():
        h0 = jnp.dot(z_ref[...].astype(w0_ref.dtype), w0_ref[...],
                     preferred_element_type=jnp.float32)
        h_ref[...] = jnp.maximum(h0 + b0_ref[...], 0.0)

    # --- hidden layer l: Linear (bias dropped; cancelled by BN) + BN + ReLU ---
    h = jnp.dot(h_ref[...].astype(w_ref.dtype), w_ref[0],
                preferred_element_type=jnp.float32)
    mean = jnp.mean(h, axis=0, keepdims=True)
    var = jnp.mean(jnp.square(h - mean), axis=0, keepdims=True)  # biased, two-pass
    s = g_ref[0] * lax.rsqrt(var + BN_EPS)
    shift = be_ref[0] - mean * s
    h_ref[...] = jnp.maximum(h * s + shift, 0.0)

    # --- fused output heads (runs once, last step) ---
    @pl.when(l == pl.num_programs(0) - 1)
    def _():
        y = jnp.dot(h_ref[...].astype(wh_ref.dtype), wh_ref[...],
                    preferred_element_type=jnp.float32) + bh_ref[...]
        half = wh_ref.shape[1] // 2
        mu_ref[...] = y[:, :half]
        scale_ref[...] = jnp.exp(0.5 * y[:, half:])   # exp only on log_var half


def init_params(key, latent_dim, in_channels, n_channels=(256, 256, 256, 256)):
    """PyTorch-default-style init (Linear: U(-1/sqrt(fan_in), ..), BN: gamma=1,
    beta=0). Produces the *full* parameter set of the original module
    (including the BN-layer Linear biases the kernel provably doesn't need)."""
    def linear(k, din, dout):
        kw, kb = jax.random.split(k)
        bound = 1.0 / math.sqrt(din)
        w = jax.random.uniform(kw, (din, dout), jnp.float32, -bound, bound)
        b = jax.random.uniform(kb, (1, dout), jnp.float32, -bound, bound)
        return w, b

    keys = jax.random.split(key, 6)
    p = {}
    p['w0'], p['b0'] = linear(keys[0], latent_dim, n_channels[0])
    for i in range(1, len(n_channels)):
        w, b = linear(keys[i], n_channels[i - 1], n_channels[i])
        p[f'w{i}'], p[f'b{i}'] = w, b
        p[f'g{i}'] = jnp.ones((1, n_channels[i]), jnp.float32)
        p[f'be{i}'] = jnp.zeros((1, n_channels[i]), jnp.float32)
    p['wmu'], p['bmu'] = linear(keys[4], n_channels[-1], in_channels)
    p['wvar'], p['bvar'] = linear(keys[5], n_channels[-1], in_channels)
    return p


def pack_params(p, matmul_dtype=jnp.float32):
    """Pack module params into the kernel's stacked operand layout.
    matmul_dtype=jnp.bfloat16 enables the bf16-input / f32-accumulate MXU path
    (v6e/v7x); biases and BN params stay f32."""
    w_stack = jnp.stack([p['w1'], p['w2'], p['w3']], axis=0).astype(matmul_dtype)  # [3,256,256]
    g_stack = jnp.stack([p['g1'], p['g2'], p['g3']], axis=0)                       # [3,1,256]
    be_stack = jnp.stack([p['be1'], p['be2'], p['be3']], axis=0)                   # [3,1,256]
    w_head = jnp.concatenate([p['wmu'], p['wvar']], axis=1).astype(matmul_dtype)   # [256,2*in_ch]
    b_head = jnp.concatenate([p['bmu'], p['bvar']], axis=1)                        # [1,2*in_ch]
    return {
        'w0': p['w0'].astype(matmul_dtype), 'b0': p['b0'],
        'w_stack': w_stack, 'g_stack': g_stack, 'be_stack': be_stack,
        'w_head': w_head, 'b_head': b_head,
    }


def mlp_decoder_forward(z, packed):
    """Calls the fused Pallas kernel; returns (mu, scale)."""
    B, lat = z.shape
    H = packed['w_stack'].shape[-1]
    two_in_ch = packed['w_head'].shape[1]
    in_ch = two_in_ch // 2

    flops = 2 * B * (lat * H + NUM_BN_LAYERS * H * H + H * two_in_ch)
    bytes_accessed = int(
        sum(int(a.size) * a.dtype.itemsize for a in packed.values())
        + z.size * z.dtype.itemsize + 2 * B * in_ch * 4)
    cost = pl.CostEstimate(flops=flops,
                           transcendentals=B * in_ch + NUM_BN_LAYERS * H,
                           bytes_accessed=bytes_accessed)

    grid_spec = pltpu.PrefetchScalarGridSpec(
        num_scalar_prefetch=0,
        grid=(NUM_BN_LAYERS,),
        in_specs=[
            pl.BlockSpec((B, lat), lambda l: (0, 0)),          # z (resident)
            pl.BlockSpec((lat, H), lambda l: (0, 0)),          # w0 (resident)
            pl.BlockSpec((1, H), lambda l: (0, 0)),            # b0 (resident)
            pl.BlockSpec((1, H, H), lambda l: (l, 0, 0)),      # per-layer weight (pipelined)
            pl.BlockSpec((1, 1, H), lambda l: (l, 0, 0)),      # gamma[l]
            pl.BlockSpec((1, 1, H), lambda l: (l, 0, 0)),      # beta[l]
            pl.BlockSpec((H, two_in_ch), lambda l: (0, 0)),    # fused head weight
            pl.BlockSpec((1, two_in_ch), lambda l: (0, 0)),    # fused head bias
        ],
        out_specs=[
            pl.BlockSpec((B, in_ch), lambda l: (0, 0)),        # mu
            pl.BlockSpec((B, in_ch), lambda l: (0, 0)),        # scale
        ],
        scratch_shapes=[pltpu.VMEM((B, H), jnp.float32)],      # carried activation h
    )

    mu, scale = pl.pallas_call(
        mlp_decoder_kernel,
        out_shape=(jax.ShapeDtypeStruct((B, in_ch), jnp.float32),
                   jax.ShapeDtypeStruct((B, in_ch), jnp.float32)),
        grid_spec=grid_spec,
        compiler_params=pltpu.CompilerParams(
            dimension_semantics=("arbitrary",)),               # layer axis is a carry
        cost_estimate=cost,
    )(z, packed['w0'], packed['b0'], packed['w_stack'],
      packed['g_stack'], packed['be_stack'],
      packed['w_head'], packed['b_head'])
    return mu, scale


def mlp_decoder_ref(z, p):
    """Pure-JAX reference matching the original PyTorch module (with the
    BN-layer Linear biases and two-pass variance)."""
    h = jnp.maximum(z @ p['w0'] + p['b0'], 0.0)
    for i in (1, 2, 3):
        h = h @ p[f'w{i}'] + p[f'b{i}']
        mean = jnp.mean(h, axis=0, keepdims=True)
        var = jnp.mean((h - mean) ** 2, axis=0, keepdims=True)
        h = (h - mean) * lax.rsqrt(var + BN_EPS) * p[f'g{i}'] + p[f'be{i}']
        h = jnp.maximum(h, 0.0)
    mu = h @ p['wmu'] + p['bmu']
    log_var = h @ p['wvar'] + p['bvar']
    return mu, jnp.exp(0.5 * log_var)


if __name__ == "__main__":
    B, LATENT, IN_CH = 8, 32, 16

    key = jax.random.PRNGKey(0)
    kz, kp = jax.random.split(key)
    z = jax.random.normal(kz, (B, LATENT), jnp.float32)
    params = init_params(kp, LATENT, IN_CH)

    # f32 path (default): must match the reference within 1e-4.
    packed = pack_params(params)
    mu, scale = mlp_decoder_forward(z, packed)
    jax.block_until_ready((mu, scale))

    mu_ref, scale_ref = mlp_decoder_ref(z, params)
    assert mu.shape == (B, IN_CH) and scale.shape == (B, IN_CH)
    assert jnp.allclose(mu, mu_ref, rtol=1e-4, atol=1e-4)
    assert jnp.allclose(scale, scale_ref, rtol=1e-4, atol=1e-4)

    # bf16-input MXU path (v6e/v7x speed flag): exercise lowering, sanity only.
    packed_bf16 = pack_params(params, matmul_dtype=jnp.bfloat16)
    mu_b, scale_b = mlp_decoder_forward(z, packed_bf16)
    jax.block_until_ready((mu_b, scale_b))
    assert bool(jnp.all(jnp.isfinite(mu_b))) and bool(jnp.all(jnp.isfinite(scale_b)))

    print("KERNEL_OK")
</pallas_src>

<mosaic_0001>
module attributes {stable_mosaic.version = 11 : i64} {
  func.func @mlp_decoder_kernel(%arg0: i32, %arg1: memref<8x32xf32, #tpu.memory_space<vmem>>, %arg2: memref<32x256xf32, #tpu.memory_space<vmem>>, %arg3: memref<1x256xf32, #tpu.memory_space<vmem>>, %arg4: memref<1x256x256xf32, #tpu.memory_space<vmem>>, %arg5: memref<1x1x256xf32, #tpu.memory_space<vmem>>, %arg6: memref<1x1x256xf32, #tpu.memory_space<vmem>>, %arg7: memref<256x32xf32, #tpu.memory_space<vmem>>, %arg8: memref<1x32xf32, #tpu.memory_space<vmem>>, %arg9: memref<8x16xf32, #tpu.memory_space<vmem>>, %arg10: memref<8x16xf32, #tpu.memory_space<vmem>>, %arg11: memref<8x256xf32, #tpu.memory_space<vmem>>) attributes {dimension_semantics = [#tpu.dimension_semantics<arbitrary>], iteration_bounds = array<i64: 3>, scalar_prefetch = 0 : i64, scratch_operands = 1 : i64, tpu.core_type = #tpu.core_type<tc>, window_params = [{pipeline_mode = #tpu.pipeline_mode<synchronous>, transform_indices = @transform_0, window_bounds = array<i64: 8, 32>}, {pipeline_mode = #tpu.pipeline_mode<synchronous>, transform_indices = @transform_1, window_bounds = array<i64: 32, 256>}, {pipeline_mode = #tpu.pipeline_mode<synchronous>, transform_indices = @transform_2, window_bounds = array<i64: 1, 256>}, {transform_indices = @transform_3, window_bounds = array<i64: 1, 256, 256>}, {transform_indices = @transform_4, window_bounds = array<i64: 1, 1, 256>}, {transform_indices = @transform_5, window_bounds = array<i64: 1, 1, 256>}, {pipeline_mode = #tpu.pipeline_mode<synchronous>, transform_indices = @transform_6, window_bounds = array<i64: 256, 32>}, {pipeline_mode = #tpu.pipeline_mode<synchronous>, transform_indices = @transform_7, window_bounds = array<i64: 1, 32>}, {pipeline_mode = #tpu.pipeline_mode<synchronous>, transform_indices = @transform_8, window_bounds = array<i64: 8, 16>}, {pipeline_mode = #tpu.pipeline_mode<synchronous>, transform_indices = @transform_9, window_bounds = array<i64: 8, 16>}]} {
    %c0_i32 = arith.constant 0 : i32
    %0 = arith.cmpi eq, %arg0, %c0_i32 : i32
    %1 = arith.extui %0 : i1 to i32
    %c0_i32_0 = arith.constant 0 : i32
    %2 = arith.cmpi ne, %1, %c0_i32_0 : i32
    scf.if %2 {
      %c0_20 = arith.constant 0 : index
      %c0_21 = arith.constant 0 : index
      %38 = vector.load %arg1[%c0_20, %c0_21] : memref<8x32xf32, #tpu.memory_space<vmem>>, vector<8x32xf32>
      %c0_22 = arith.constant 0 : index
      %c0_23 = arith.constant 0 : index
      %39 = vector.load %arg2[%c0_22, %c0_23] : memref<32x256xf32, #tpu.memory_space<vmem>>, vector<32x256xf32>
      %cst_24 = arith.constant dense<0.000000e+00> : vector<8x256xf32>
      %40 = tpu.matmul %38, %39, %cst_24 {dimension_numbers = #tpu.dot_dimension_numbers<[1], [0], [0], [1], [0, 0, 1, 1], [], []>} : vector<8x32xf32>, vector<32x256xf32>, vector<8x256xf32> -> vector<8x256xf32>
      %c0_25 = arith.constant 0 : index
      %c0_26 = arith.constant 0 : index
      %41 = vector.load %arg3[%c0_25, %c0_26] : memref<1x256xf32, #tpu.memory_space<vmem>>, vector<1x256xf32>
      %42 = vector.broadcast %41 : vector<1x256xf32> to vector<8x256xf32>
      %43 = arith.addf %40, %42 : vector<8x256xf32>
      %cst_27 = arith.constant 0.000000e+00 : f32
      %44 = vector.broadcast %cst_27 : f32 to vector<8x256xf32>
      %45 = arith.maximumf %43, %44 : vector<8x256xf32>
      %c0_28 = arith.constant 0 : index
      %c0_29 = arith.constant 0 : index
      %46 = vector.load %arg11[%c0_28, %c0_29] : memref<8x256xf32, #tpu.memory_space<vmem>>, vector<8x256xf32>
      tpu.vector_store %arg11[%c0_28, %c0_29], %45 {strides = array<i32>} : memref<8x256xf32, #tpu.memory_space<vmem>>, vector<8x256xf32>,
    } else {
    }
    %c0 = arith.constant 0 : index
    %c0_1 = arith.constant 0 : index
    %3 = vector.load %arg11[%c0, %c0_1] : memref<8x256xf32, #tpu.memory_space<vmem>>, vector<8x256xf32>
    %c0_2 = arith.constant 0 : index
    %c0_3 = arith.constant 0 : index
    %c0_4 = arith.constant 0 : index
    %4 = vector.load %arg4[%c0_2, %c0_3, %c0_4] : memref<1x256x256xf32, #tpu.memory_space<vmem>>, vector<1x256x256xf32>
    %5 = vector.shape_cast %4 : vector<1x256x256xf32> to vector<256x256xf32>
    %cst = arith.constant dense<0.000000e+00> : vector<8x256xf32>
    %6 = tpu.matmul %3, %5, %cst {dimension_numbers = #tpu.dot_dimension_numbers<[1], [0], [0], [1], [0, 0, 1, 1], [], []>} : vector<8x256xf32>, vector<256x256xf32>, vector<8x256xf32> -> vector<8x256xf32>
    %cst_5 = arith.constant dense<0.000000e+00> : vector<256xf32>
    %7 = vector.multi_reduction <add>, %6, %cst_5 [0] : vector<8x256xf32> to vector<256xf32>
    %8 = vector.shape_cast %7 : vector<256xf32> to vector<1x256xf32>
    %cst_6 = arith.constant 8.000000e+00 : f32
    %9 = vector.broadcast %cst_6 : f32 to vector<1x256xf32>
    %10 = arith.divf %8, %9 : vector<1x256xf32>
    %11 = vector.broadcast %10 : vector<1x256xf32> to vector<8x256xf32>
    %12 = arith.subf %6, %11 : vector<8x256xf32>
    %13 = arith.mulf %12, %12 : vector<8x256xf32>
    %cst_7 = arith.constant dense<0.000000e+00> : vector<256xf32>
    %14 = vector.multi_reduction <add>, %13, %cst_7 [0] : vector<8x256xf32> to vector<256xf32>
    %15 = vector.shape_cast %14 : vector<256xf32> to vector<1x256xf32>
    %cst_8 = arith.constant 8.000000e+00 : f32
    %16 = vector.broadcast %cst_8 : f32 to vector<1x256xf32>
    %17 = arith.divf %15, %16 : vector<1x256xf32>
    %c0_9 = arith.constant 0 : index
    %c0_10 = arith.constant 0 : index
    %c0_11 = arith.constant 0 : index
    %18 = vector.load %arg5[%c0_9, %c0_10, %c0_11] : memref<1x1x256xf32, #tpu.memory_space<vmem>>, vector<1x1x256xf32>
    %19 = vector.shape_cast %18 : vector<1x1x256xf32> to vector<1x256xf32>
    %cst_12 = arith.constant 9.99999974E-6 : f32
    %20 = vector.broadcast %cst_12 : f32 to vector<1x256xf32>
    %21 = arith.addf %17, %20 : vector<1x256xf32>
    %22 = math.rsqrt %21 : vector<1x256xf32>
    %23 = arith.mulf %19, %22 : vector<1x256xf32>
    %c0_13 = arith.constant 0 : index
    %c0_14 = arith.constant 0 : index
    %c0_15 = arith.constant 0 : index
    %24 = vector.load %arg6[%c0_13, %c0_14, %c0_15] : memref<1x1x256xf32, #tpu.memory_space<vmem>>, vector<1x1x256xf32>
    %25 = vector.shape_cast %24 : vector<1x1x256xf32> to vector<1x256xf32>
    %26 = arith.mulf %10, %23 : vector<1x256xf32>
    %27 = arith.subf %25, %26 : vector<1x256xf32>
    %28 = vector.broadcast %23 : vector<1x256xf32> to vector<8x256xf32>
    %29 = arith.mulf %6, %28 : vector<8x256xf32>
    %30 = vector.broadcast %27 : vector<1x256xf32> to vector<8x256xf32>
    %31 = arith.addf %29, %30 : vector<8x256xf32>
    %cst_16 = arith.constant 0.000000e+00 : f32
    %32 = vector.broadcast %cst_16 : f32 to vector<8x256xf32>
    %33 = arith.maximumf %31, %32 : vector<8x256xf32>
    %c0_17 = arith.constant 0 : index
    %c0_18 = arith.constant 0 : index
    %34 = vector.load %arg11[%c0_17, %c0_18] : memref<8x256xf32, #tpu.memory_space<vmem>>, vector<8x256xf32>
    tpu.vector_store %arg11[%c0_17, %c0_18], %33 {strides = array<i32>} : memref<8x256xf32, #tpu.memory_space<vmem>>, vector<8x256xf32>,
    %c2_i32 = arith.constant 2 : i32
    %35 = arith.cmpi eq, %arg0, %c2_i32 : i32
    %36 = arith.extui %35 : i1 to i32
    %c0_i32_19 = arith.constant 0 : i32
    %37 = arith.cmpi ne, %36, %c0_i32_19 : i32
    scf.if %37 {
      %c0_20 = arith.constant 0 : index
      %c0_21 = arith.constant 0 : index
      %38 = vector.load %arg11[%c0_20, %c0_21] : memref<8x256xf32, #tpu.memory_space<vmem>>, vector<8x256xf32>
      %c0_22 = arith.constant 0 : index
      %c0_23 = arith.constant 0 : index
      %39 = vector.load %arg7[%c0_22, %c0_23] : memref<256x32xf32, #tpu.memory_space<vmem>>, vector<256x32xf32>
      %cst_24 = arith.constant dense<0.000000e+00> : vector<8x32xf32>
      %40 = tpu.matmul %38, %39, %cst_24 {dimension_numbers = #tpu.dot_dimension_numbers<[1], [0], [0], [1], [0, 0, 1, 1], [], []>} : vector<8x256xf32>, vector<256x32xf32>, vector<8x32xf32> -> vector<8x32xf32>
      %c0_25 = arith.constant 0 : index
      %c0_26 = arith.constant 0 : index
      %41 = vector.load %arg8[%c0_25, %c0_26] : memref<1x32xf32, #tpu.memory_space<vmem>>, vector<1x32xf32>
      %42 = vector.broadcast %41 : vector<1x32xf32> to vector<8x32xf32>
      %43 = arith.addf %40, %42 : vector<8x32xf32>
      %44 = vector.extract_strided_slice %43 {offsets = [0, 0], sizes = [8, 16], strides = [1, 1]} : vector<8x32xf32> to vector<8x16xf32>
      %c0_27 = arith.constant 0 : index
      %c0_28 = arith.constant 0 : index
      %45 = vector.load %arg9[%c0_27, %c0_28] : memref<8x16xf32, #tpu.memory_space<vmem>>, vector<8x16xf32>
      tpu.vector_store %arg9[%c0_27, %c0_28], %44 {strides = array<i32>} : memref<8x16xf32, #tpu.memory_space<vmem>>, vector<8x16xf32>,
      %46 = vector.extract_strided_slice %43 {offsets = [0, 16], sizes = [8, 16], strides = [1, 1]} : vector<8x32xf32> to vector<8x16xf32>
      %cst_29 = arith.constant 5.000000e-01 : f32
      %47 = vector.broadcast %cst_29 : f32 to vector<8x16xf32>
      %48 = arith.mulf %47, %46 : vector<8x16xf32>
      %49 = math.exp %48 : vector<8x16xf32>
      %c0_30 = arith.constant 0 : index
      %c0_31 = arith.constant 0 : index
      %50 = vector.load %arg10[%c0_30, %c0_31] : memref<8x16xf32, #tpu.memory_space<vmem>>, vector<8x16xf32>
      tpu.vector_store %arg10[%c0_30, %c0_31], %49 {strides = array<i32>} : memref<8x16xf32, #tpu.memory_space<vmem>>, vector<8x16xf32>,
    } else {
    }
    return
  }
  func.func @transform_0(%arg0: i32) -> (i32, i32) {
    %c0_i32 = arith.constant 0 : i32
    %c0_i32_0 = arith.constant 0 : i32
    %c0_i32_1 = arith.constant 0 : i32
    return %c0_i32, %c0_i32_0 : i32, i32
  }
  func.func @transform_1(%arg0: i32) -> (i32, i32) {
    %c0_i32 = arith.constant 0 : i32
    %c0_i32_0 = arith.constant 0 : i32
    %c0_i32_1 = arith.constant 0 : i32
    return %c0_i32, %c0_i32_0 : i32, i32
  }
  func.func @transform_2(%arg0: i32) -> (i32, i32) {
    %c0_i32 = arith.constant 0 : i32
    %c0_i32_0 = arith.constant 0 : i32
    %c0_i32_1 = arith.constant 0 : i32
    return %c0_i32, %c0_i32_0 : i32, i32
  }
  func.func @transform_3(%arg0: i32) -> (i32, i32, i32) {
    %c0_i32 = arith.constant 0 : i32
    %c0_i32_0 = arith.constant 0 : i32
    %c0_i32_1 = arith.constant 0 : i32
    return %arg0, %c0_i32, %c0_i32_0 : i32, i32, i32
  }
  func.func @transform_4(%arg0: i32) -> (i32, i32, i32) {
    %c0_i32 = arith.constant 0 : i32
    %c0_i32_0 = arith.constant 0 : i32
    %c0_i32_1 = arith.constant 0 : i32
    return %arg0, %c0_i32, %c0_i32_0 : i32, i32, i32
  }
  func.func @transform_5(%arg0: i32) -> (i32, i32, i32) {
    %c0_i32 = arith.constant 0 : i32
    %c0_i32_0 = arith.constant 0 : i32
    %c0_i32_1 = arith.constant 0 : i32
    return %arg0, %c0_i32, %c0_i32_0 : i32, i32, i32
  }
  func.func @transform_6(%arg0: i32) -> (i32, i32) {
    %c0_i32 = arith.constant 0 : i32
    %c0_i32_0 = arith.constant 0 : i32
    %c0_i32_1 = arith.constant 0 : i32
    return %c0_i32, %c0_i32_0 : i32, i32
  }
  func.func @transform_7(%arg0: i32) -> (i32, i32) {
    %c0_i32 = arith.constant 0 : i32
    %c0_i32_0 = arith.constant 0 : i32
    %c0_i32_1 = arith.constant 0 : i32
    return %c0_i32, %c0_i32_0 : i32, i32
  }
  func.func @transform_8(%arg0: i32) -> (i32, i32) {
    %c0_i32 = arith.constant 0 : i32
    %c0_i32_0 = arith.constant 0 : i32
    %c0_i32_1 = arith.constant 0 : i32
    return %c0_i32, %c0_i32_0 : i32, i32
  }
  func.func @transform_9(%arg0: i32) -> (i32, i32) {
    %c0_i32 = arith.constant 0 : i32
    %c0_i32_0 = arith.constant 0 : i32
    %c0_i32_1 = arith.constant 0 : i32
    return %c0_i32, %c0_i32_0 : i32, i32
  }
}

</mosaic_0001>

<llo_original>
// kernel: tpu_custom_call.1
$region0: #{tpu_custom_call.1}
  #allocation0 [shape = 'u32[]', space=smem, size = 0x4, offset = 0x4, fixed_abs, tag = 'smem constant byte address 0x4 - core index']
  #allocation1 [shape = 'u32[72,128]{1,0:T(1,128)}', space=vmem, size = 0x9000, scoped, tag = 'internal scratch']
  #allocation2 [shape = 'f32[8,256]{1,0:T(8,128)}', space=vmem, size = 0x2000, scoped, tag = 'scratch operand']
  %s0 = inlined_call_operand.vmem [shape: f32[8,32], index: 0, kind: input, shape index: {}]
  %s1 = inlined_call_operand.vmem [shape: f32[32,256], index: 1, kind: input, shape index: {}]
  %s2 = inlined_call_operand.vmem [shape: f32[1,256], index: 2, kind: input, shape index: {}]
  %s3 = inlined_call_operand.hbm [shape: f32[3,256,256], index: 3, kind: input, shape index: {}]
  %s4 = inlined_call_operand.vmem [shape: f32[3,1,256], index: 4, kind: input, shape index: {}]
  %s5 = inlined_call_operand.vmem [shape: f32[3,1,256], index: 5, kind: input, shape index: {}]
  %s6 = inlined_call_operand.vmem [shape: f32[256,32], index: 6, kind: input, shape index: {}]
  %s7 = inlined_call_operand.vmem [shape: f32[1,32], index: 7, kind: input, shape index: {}]
  %s8 = inlined_call_operand.hbm [shape: f32[8,16], index: 8, kind: output, shape index: {0}]
  %s9 = inlined_call_operand.hbm [shape: f32[8,16], index: 9, kind: output, shape index: {1}]
  %10 = xla_tuple %s8, %s9
  %s11 = sld [smem:[#allocation0]]
  $region85: #{tpu_custom_call.1} parent=0
    _
  %s13 = ssub.s32 1, %s11
  %s14 = scalar_select 0, %s13, %s11
  $region1: #{tpu_custom_call.1} parent=0
    #allocation3 [shape = 'u8[524288]{0}', space=vmem, size = 0x80000, scoped, tag = 'input window, operand 3']
    #allocation4 [shape = 's32[2]{0}', space=sflag, size = 0x8, scoped, tag = 'scoped memory for tpu_custom_call.1']
    #allocation5 [shape = 's32[2]{0}', space=sflag, size = 0x8, scoped, tag = 'scoped memory for tpu_custom_call.1']
    #allocation6 [shape = 'u8[4096]{0}', space=vmem, size = 0x1000, scoped, tag = 'output window, operand 0, single buffered']
    #allocation7 [shape = 'u8[4096]{0}', space=vmem, size = 0x1000, scoped, tag = 'output window, operand 1, single buffered']
    #allocation8 [shape = 's32[1]{0}', space=sflag, size = 0x4, scoped, tag = 'scoped memory for tpu_custom_call.1']
    %15 = vsyncpa [#allocation4], 0
    %s16 = scalar_lea.sflag [#allocation4], 1
    %17 = vsyncpa %s16, 0
    %18 = vsyncpa [#allocation5], 0
    %19 = vsyncpa [#allocation8], 0
    loop: start=0, step=1, limit=5
    $region2: #{tpu_custom_call.1} parent=1 // loop_pre_header
      _
    $region3: #{tpu_custom_call.1} parent=1 // loop_header
      %s21 = sphi 0, %s25
      %p22 = scmp.ge.s32.totalorder %s21, 5
      %s29 = sphi 0, %s29
      %s31 = sphi 0, %s29
      %s32 = sphi 0, %s31
      %s46 = sphi 0, %s32
      %s50 = sphi 0, %s50
      %s52 = sphi 0, %s50
      %s53 = sphi 0, %s52
      %s67 = sphi 0, %s53
      %s71 = sphi 0, %s71
      %s73 = sphi 0, %s71
      %s74 = sphi 0, %s73
      %s88 = sphi 0, %s74
      %s94 = sphi 0, %s96
      %s97 = sphi 0, %s94
      %s98 = sphi 0, %s97
      %s114 = sphi 0, %s98
      %s120 = sphi 0, %s122
      %s123 = sphi 0, %s120
      %s124 = sphi 0, %s123
      %s140 = sphi 0, %s124
      %s146 = sphi 0, %s148
      %s149 = sphi 0, %s146
      %s150 = sphi 0, %s149
      %s166 = sphi 0, %s150
      %s170 = sphi 0, %s170
      %s172 = sphi 0, %s170
      %s173 = sphi 0, %s172
      %s187 = sphi 0, %s173
      %s191 = sphi 0, %s191
      %s193 = sphi 0, %s191
      %s194 = sphi 0, %s193
      %s208 = sphi 0, %s194
      %s212 = sphi 0, %s212
      %s214 = sphi 0, %s212
      %s215 = sphi 0, %s214
      %s229 = sphi 0, %s215
      %s233 = sphi 0, %s233
      %s235 = sphi 0, %s233
      %s236 = sphi 0, %s235
      %s250 = sphi 0, %s236
    $region4: #{tpu_custom_call.1} parent=1 // loop_header_branch
      %24 = sbr.rel (%p22) target = $region8
    $region5: #{tpu_custom_call.1} parent=1 // loop_body
      %s26 = ssub.s32 %s21, 1
      %s27 = ssub.s32 %s21, 2
      %s28 = sadd.s32 %s21, 1
      %s30 = sadd.s32 %s29, 1
      %p33 = scmp.eq.s32.totalorder %s21, 2
      %p34 = scmp.ne.s32.totalorder %s29, %s31
      %p35 = scmp.eq.s32.totalorder %s21, 0
      %p36 = por %p34, %p35
      %p37 = scmp.ne.s32.totalorder %s29, %s31
      %p38 = scmp.eq.s32.totalorder %s26, 2
      %p39 = por %p37, %p38
      %p40 = scmp.ne.s32.totalorder %s31, %s32
      %p41 = scmp.eq.s32.totalorder %s26, 0
      %p42 = por %p40, %p41
      %p43 = scmp.ne.s32.totalorder %s31, %s32
      %p44 = scmp.eq.s32.totalorder %s27, 2
      %p45 = por %p43, %p44
      %p47 = scmp.ne.s32.totalorder %s32, %s46
      %p48 = scmp.eq.s32.totalorder %s27, 0
      %p49 = por %p47, %p48
      %s51 = sadd.s32 %s50, 1
      %p54 = scmp.eq.s32.totalorder %s21, 2
      %p55 = scmp.ne.s32.totalorder %s50, %s52
      %p56 = scmp.eq.s32.totalorder %s21, 0
      %p57 = por %p55, %p56
      %p58 = scmp.ne.s32.totalorder %s50, %s52
      %p59 = scmp.eq.s32.totalorder %s26, 2
      %p60 = por %p58, %p59
      %p61 = scmp.ne.s32.totalorder %s52, %s53
      %p62 = scmp.eq.s32.totalorder %s26, 0
      %p63 = por %p61, %p62
      %p64 = scmp.ne.s32.totalorder %s52, %s53
      %p65 = scmp.eq.s32.totalorder %s27, 2
      %p66 = por %p64, %p65
      %p68 = scmp.ne.s32.totalorder %s53, %s67
      %p69 = scmp.eq.s32.totalorder %s27, 0
      %p70 = por %p68, %p69
      %s72 = sadd.s32 %s71, 1
      %p75 = scmp.eq.s32.totalorder %s21, 2
      %p76 = scmp.ne.s32.totalorder %s71, %s73
      %p77 = scmp.eq.s32.totalorder %s21, 0
      %p78 = por %p76, %p77
      %p79 = scmp.ne.s32.totalorder %s71, %s73
      %p80 = scmp.eq.s32.totalorder %s26, 2
      %p81 = por %p79, %p80
      %p82 = scmp.ne.s32.totalorder %s73, %s74
      %p83 = scmp.eq.s32.totalorder %s26, 0
      %p84 = por %p82, %p83
      %p85 = scmp.ne.s32.totalorder %s73, %s74
      %p86 = scmp.eq.s32.totalorder %s27, 2
      %p87 = por %p85, %p86
      %p89 = scmp.ne.s32.totalorder %s74, %s88
      %p90 = scmp.eq.s32.totalorder %s27, 0
      %p91 = por %p89, %p90
      %s92 = ssub.s32 %s21, %s28
      %p93 = scmp.eq.s32.totalorder %s92, 0
      %s95 = sadd.s32 %s94, 1
      %s96 = scalar_select %p93, %s94, %s95
      %p99 = pneg %p93
      %p100 = scmp.eq.s32.totalorder %s21, 2
      %p101 = por %p99, %p100
      %p102 = scmp.ne.s32.totalorder %s94, %s97
      %p103 = scmp.eq.s32.totalorder %s21, 0
      %p104 = por %p102, %p103
      %p105 = scmp.ne.s32.totalorder %s94, %s97
      %p106 = scmp.eq.s32.totalorder %s26, 2
      %p107 = por %p105, %p106
      %p108 = scmp.ne.s32.totalorder %s97, %s98
      %p109 = scmp.eq.s32.totalorder %s26, 0
      %p110 = por %p108, %p109
      %p111 = scmp.ne.s32.totalorder %s97, %s98
      %p112 = scmp.eq.s32.totalorder %s27, 2
      %p113 = por %p111, %p112
      %p115 = scmp.ne.s32.totalorder %s98, %s114
      %p116 = scmp.eq.s32.totalorder %s27, 0
      %p117 = por %p115, %p116
      %s118 = ssub.s32 %s21, %s28
      %p119 = scmp.eq.s32.totalorder %s118, 0
      %s121 = sadd.s32 %s120, 1
      %s122 = scalar_select %p119, %s120, %s121
      %p125 = pneg %p119
      %p126 = scmp.eq.s32.totalorder %s21, 2
      %p127 = por %p125, %p126
      %p128 = scmp.ne.s32.totalorder %s120, %s123
      %p129 = scmp.eq.s32.totalorder %s21, 0
      %p130 = por %p128, %p129
      %p131 = scmp.ne.s32.totalorder %s120, %s123
      %p132 = scmp.eq.s32.totalorder %s26, 2
      %p133 = por %p131, %p132
      %p134 = scmp.ne.s32.totalorder %s123, %s124
      %p135 = scmp.eq.s32.totalorder %s26, 0
      %p136 = por %p134, %p135
      %p137 = scmp.ne.s32.totalorder %s123, %s124
      %p138 = scmp.eq.s32.totalorder %s27, 2
      %p139 = por %p137, %p138
      %p141 = scmp.ne.s32.totalorder %s124, %s140
      %p142 = scmp.eq.s32.totalorder %s27, 0
      %p143 = por %p141, %p142
      %s144 = ssub.s32 %s21, %s28
      %p145 = scmp.eq.s32.totalorder %s144, 0
      %s147 = sadd.s32 %s146, 1
      %s148 = scalar_select %p145, %s146, %s147
      %p151 = pneg %p145
      %p152 = scmp.eq.s32.totalorder %s21, 2
      %p153 = por %p151, %p152
      %p154 = scmp.ne.s32.totalorder %s146, %s149
      %p155 = scmp.eq.s32.totalorder %s21, 0
      %p156 = por %p154, %p155
      %p157 = scmp.ne.s32.totalorder %s146, %s149
      %p158 = scmp.eq.s32.totalorder %s26, 2
      %p159 = por %p157, %p158
      %p160 = scmp.ne.s32.totalorder %s149, %s150
      %p161 = scmp.eq.s32.totalorder %s26, 0
      %p162 = por %p160, %p161
      %p163 = scmp.ne.s32.totalorder %s149, %s150
      %p164 = scmp.eq.s32.totalorder %s27, 2
      %p165 = por %p163, %p164
      %p167 = scmp.ne.s32.totalorder %s150, %s166
      %p168 = scmp.eq.s32.totalorder %s27, 0
      %p169 = por %p167, %p168
      %s171 = sadd.s32 %s170, 1
      %p174 = scmp.eq.s32.totalorder %s21, 2
      %p175 = scmp.ne.s32.totalorder %s170, %s172
      %p176 = scmp.eq.s32.totalorder %s21, 0
      %p177 = por %p175, %p176
      %p178 = scmp.ne.s32.totalorder %s170, %s172
      %p179 = scmp.eq.s32.totalorder %s26, 2
      %p180 = por %p178, %p179
      %p181 = scmp.ne.s32.totalorder %s172, %s173
      %p182 = scmp.eq.s32.totalorder %s26, 0
      %p183 = por %p181, %p182
      %p184 = scmp.ne.s32.totalorder %s172, %s173
      %p185 = scmp.eq.s32.totalorder %s27, 2
      %p186 = por %p184, %p185
      %p188 = scmp.ne.s32.totalorder %s173, %s187
      %p189 = scmp.eq.s32.totalorder %s27, 0
      %p190 = por %p188, %p189
      %s192 = sadd.s32 %s191, 1
      %p195 = scmp.eq.s32.totalorder %s21, 2
      %p196 = scmp.ne.s32.totalorder %s191, %s193
      %p197 = scmp.eq.s32.totalorder %s21, 0
      %p198 = por %p196, %p197
      %p199 = scmp.ne.s32.totalorder %s191, %s193
      %p200 = scmp.eq.s32.totalorder %s26, 2
      %p201 = por %p199, %p200
      %p202 = scmp.ne.s32.totalorder %s193, %s194
      %p203 = scmp.eq.s32.totalorder %s26, 0
      %p204 = por %p202, %p203
      %p205 = scmp.ne.s32.totalorder %s193, %s194
      %p206 = scmp.eq.s32.totalorder %s27, 2
      %p207 = por %p205, %p206
      %p209 = scmp.ne.s32.totalorder %s194, %s208
      %p210 = scmp.eq.s32.totalorder %s27, 0
      %p211 = por %p209, %p210
      %s213 = sadd.s32 %s212, 1
      %p216 = scmp.eq.s32.totalorder %s21, 2
      %p217 = scmp.ne.s32.totalorder %s212, %s214
      %p218 = scmp.eq.s32.totalorder %s21, 0
      %p219 = por %p217, %p218
      %p220 = scmp.ne.s32.totalorder %s212, %s214
      %p221 = scmp.eq.s32.totalorder %s26, 2
      %p222 = por %p220, %p221
      %p223 = scmp.ne.s32.totalorder %s214, %s215
      %p224 = scmp.eq.s32.totalorder %s26, 0
      %p225 = por %p223, %p224
      %p226 = scmp.ne.s32.totalorder %s214, %s215
      %p227 = scmp.eq.s32.totalorder %s27, 2
      %p228 = por %p226, %p227
      %p230 = scmp.ne.s32.totalorder %s215, %s229
      %p231 = scmp.eq.s32.totalorder %s27, 0
      %p232 = por %p230, %p231
      %s234 = sadd.s32 %s233, 1
      %p237 = scmp.eq.s32.totalorder %s21, 2
      %p238 = scmp.ne.s32.totalorder %s233, %s235
      %p239 = scmp.eq.s32.totalorder %s21, 0
      %p240 = por %p238, %p239
      %p241 = scmp.ne.s32.totalorder %s233, %s235
      %p242 = scmp.eq.s32.totalorder %s26, 2
      %p243 = por %p241, %p242
      %p244 = scmp.ne.s32.totalorder %s235, %s236
      %p245 = scmp.eq.s32.totalorder %s26, 0
      %p246 = por %p244, %p245
      %p247 = scmp.ne.s32.totalorder %s235, %s236
      %p248 = scmp.eq.s32.totalorder %s27, 2
      %p249 = por %p247, %p248
      %p251 = scmp.ne.s32.totalorder %s236, %s250
      %p252 = scmp.eq.s32.totalorder %s27, 0
      %p253 = por %p251, %p252
      %p254 = scmp.le.s32.totalorder 1, %s21
      %p255 = scmp.lt.s32.totalorder %s21, 4
      %p256 = pnand %p254, %p255
      %p257 = pneg %p256
      // Predicated region
      $region9: #{tpu_custom_call.1} parent=5 // pred_check
        _
      $region10: #{tpu_custom_call.1} parent=5 // pred_check_branch
        %259 = sbr.rel (%p256) target = $region12
      $region11: #{tpu_custom_call.1} parent=5 // pred_region
        %s260 = ssub.s32 %s21, 1
        // Predicated region
        $region13: #{tpu_custom_call.1} parent=11 // pred_check
          %p261 = pneg %p42
        $region14: #{tpu_custom_call.1} parent=11 // pred_check_branch
          %263 = sbr.rel (%p261) target = $region16
        $region15: #{tpu_custom_call.1} parent=11 // pred_region
          _
        $region16: #{tpu_custom_call.1} parent=11 // pred_fallthru
          _
        // Predicated region
        $region17: #{tpu_custom_call.1} parent=11 // pred_check
          %p264 = pneg %p63
        $region18: #{tpu_custom_call.1} parent=11 // pred_check_branch
          %266 = sbr.rel (%p264) target = $region20
        $region19: #{tpu_custom_call.1} parent=11 // pred_region
          _
        $region20: #{tpu_custom_call.1} parent=11 // pred_fallthru
          _
        // Predicated region
        $region21: #{tpu_custom_call.1} parent=11 // pred_check
          %p267 = pneg %p84
        $region22: #{tpu_custom_call.1} parent=11 // pred_check_branch
          %269 = sbr.rel (%p267) target = $region24
        $region23: #{tpu_custom_call.1} parent=11 // pred_region
          _
        $region24: #{tpu_custom_call.1} parent=11 // pred_fallthru
          _
        // Predicated region
        $region25: #{tpu_custom_call.1} parent=11 // pred_check
          %p270 = pneg %p183
        $region26: #{tpu_custom_call.1} parent=11 // pred_check_branch
          %272 = sbr.rel (%p270) target = $region28
        $region27: #{tpu_custom_call.1} parent=11 // pred_region
          _
        $region28: #{tpu_custom_call.1} parent=11 // pred_fallthru
          _
        // Predicated region
        $region29: #{tpu_custom_call.1} parent=11 // pred_check
          %p273 = pneg %p204
        $region30: #{tpu_custom_call.1} parent=11 // pred_check_branch
          %275 = sbr.rel (%p273) target = $region32
        $region31: #{tpu_custom_call.1} parent=11 // pred_region
          _
        $region32: #{tpu_custom_call.1} parent=11 // pred_fallthru
          _
      $region12: #{tpu_custom_call.1} parent=5 // pred_fallthru
        _
      %p276 = scmp.lt.s32.totalorder %s21, 3
      // Predicated region
      $region33: #{tpu_custom_call.1} parent=5 // pred_check
        %p277 = pneg %p276
      $region34: #{tpu_custom_call.1} parent=5 // pred_check_branch
        %279 = sbr.rel (%p277) target = $region36
      $region35: #{tpu_custom_call.1} parent=5 // pred_region
        // Predicated region
        $region37: #{tpu_custom_call.1} parent=35 // pred_check
          %p280 = pneg %p104
        $region38: #{tpu_custom_call.1} parent=35 // pred_check_branch
          %282 = sbr.rel (%p280) target = $region40
        $region39: #{tpu_custom_call.1} parent=35 // pred_region
          %s283 = sand.u32 %s94, 1
          %s284 = scalar_lea.sflag [#allocation4], %s283
          %s285 = sand.u32 %s94, 1
          %s286 = smul.addr %s285, 512
          %s287 = scalar_lea.vmem [#allocation3], %s286
          %289 = vsyncadd %s284, 0
          %s290 = smul.addr %s21, 64
          %s291 = smul.addr %s290, 8
          %s292 = scalar_lea.hbm %s3, %s291
          %s293 = sshll.u32 %s292, 4
          %s294 = int_to_ptr.hbm [resolvable:$true] %s293
          %s295 = sshll.u32 %s287, 4
          %s296 = int_to_ptr.vmem [resolvable:$true] %s295
          %301 = dma.hbm_to_vmem [thread:$0]  %s294, 8192, %s296, %s284, 256, 256, 16
        $region40: #{tpu_custom_call.1} parent=35 // pred_fallthru
          _
        // Predicated region
        $region41: #{tpu_custom_call.1} parent=35 // pred_check
          %p302 = pneg %p130
        $region42: #{tpu_custom_call.1} parent=35 // pred_check_branch
          %304 = sbr.rel (%p302) target = $region44
        $region43: #{tpu_custom_call.1} parent=35 // pred_region
          %p305 = scmp.lt.s32.totalorder %s21, 2
          %s306 = scalar_select %p305, %s21, 2
          %s307 = smul.addr %s306, 2
          %s308 = scalar_lea.vmem %s4, %s307
        $region44: #{tpu_custom_call.1} parent=35 // pred_fallthru
          _
        // Predicated region
        $region45: #{tpu_custom_call.1} parent=35 // pred_check
          %p309 = pneg %p156
        $region46: #{tpu_custom_call.1} parent=35 // pred_check_branch
          %311 = sbr.rel (%p309) target = $region48
        $region47: #{tpu_custom_call.1} parent=35 // pred_region
          %p312 = scmp.lt.s32.totalorder %s21, 2
          %s313 = scalar_select %p312, %s21, 2
          %s314 = smul.addr %s313, 2
          %s315 = scalar_lea.vmem %s5, %s314
        $region48: #{tpu_custom_call.1} parent=35 // pred_fallthru
          _
      $region36: #{tpu_custom_call.1} parent=5 // pred_fallthru
        _
      %p316 = scmp.le.s32.totalorder 1, %s21
      %p317 = scmp.lt.s32.totalorder %s21, 4
      %p318 = pnand %p316, %p317
      %p319 = pneg %p318
      // Predicated region
      $region49: #{tpu_custom_call.1} parent=5 // pred_check
        _
      $region50: #{tpu_custom_call.1} parent=5 // pred_check_branch
        %321 = sbr.rel (%p318) target = $region52
      $region51: #{tpu_custom_call.1} parent=5 // pred_region
        %s322 = ssub.s32 %s21, 1
        %s323 = sand.u32 %s97, 1
        %s324 = scalar_lea.sflag [#allocation4], %s323
        %s325 = sand.u32 %s97, 1
        %s326 = smul.addr %s325, 512
        %s327 = scalar_lea.vmem [#allocation3], %s326
        // Predicated region
        $region53: #{tpu_custom_call.1} parent=51 // pred_check
          %p328 = pneg %p110
        $region54: #{tpu_custom_call.1} parent=51 // pred_check_branch
          %330 = sbr.rel (%p328) target = $region56
        $region55: #{tpu_custom_call.1} parent=51 // pred_region
          %332 = dma.done %s324, 8192
        $region56: #{tpu_custom_call.1} parent=51 // pred_fallthru
          _
        %p333 = pneg %p42
        %p334 = pneg %p39
        %p335 = pneg %p63
        %p336 = pneg %p60
        %p337 = pneg %p84
        %p338 = pneg %p81
        %s339 = sand.u32 %s97, 1
        %s340 = scalar_lea.sflag [#allocation4], %s339
        %s341 = sand.u32 %s97, 1
        %s342 = smul.addr %s341, 512
        %s343 = scalar_lea.vmem [#allocation3], %s342
        %p344 = pneg %p110
        %p345 = pneg %p107
        %p346 = scmp.lt.s32.totalorder %s26, 2
        %s347 = scalar_select %p346, %s26, 2
        %s348 = smul.addr %s347, 2
        %s349 = scalar_lea.vmem %s4, %s348
        %p350 = pneg %p136
        %p351 = pneg %p133
        %p352 = scmp.lt.s32.totalorder %s26, 2
        %s353 = scalar_select %p352, %s26, 2
        %s354 = smul.addr %s353, 2
        %s355 = scalar_lea.vmem %s5, %s354
        %p356 = pneg %p162
        %p357 = pneg %p159
        %p358 = pneg %p183
        %p359 = pneg %p180
        %p360 = pneg %p204
        %p361 = pneg %p201
        %p362 = pneg %p225
        %p363 = pneg %p222
        %p364 = pneg %p246
        %p365 = pneg %p243
        %p366 = scmp.lt.s32.totalorder %s26, 2
        %s367 = scalar_select %p366, %s26, 2
        %s368 = smul.addr %s367, 2
        %s369 = scalar_lea.vmem %s4, %s368
        %p370 = scmp.lt.s32.totalorder %s26, 2
        %s371 = scalar_select %p370, %s26, 2
        %s372 = smul.addr %s371, 2
        %s373 = scalar_lea.vmem %s5, %s372
        %p374 = scmp.eq.s32.totalorder %s26, 0
        // Predicated region
        $region57: #{tpu_custom_call.1} parent=51 // pred_check
          %p375 = pneg %p374
        $region58: #{tpu_custom_call.1} parent=51 // pred_check_branch
          %377 = sbr.rel (%p375) target = $region60
        $region59: #{tpu_custom_call.1} parent=51 // pred_region
          %v378 = vld [vmem:[%s0] sm:$0xff]
          %v379 = vld [vmem:[%s1] sm:$0xff]
          %v380 = vld [vmem:[%s1 + $0x8] sm:$0xff]
          %v381 = vld [vmem:[%s1 + $0x10] sm:$0xff]
          %v382 = vld [vmem:[%s1 + $0x18] sm:$0xff]
          %v383 = vld [vmem:[%s1 + $0x20] sm:$0xff]
          %v384 = vld [vmem:[%s1 + $0x28] sm:$0xff]
          %v385 = vld [vmem:[%s1 + $0x30] sm:$0xff]
          %v386 = vld [vmem:[%s1 + $0x38] sm:$0xff]
          %v387 = vld [vmem:[%s2] sm:$0x3]
          %v389 = vperm.slane %v387, 0
          %v390 = vperm.slane %v387, 1
          %vm393 = vcmask 261120
          %v395 = vsel %vm393, %v378, 0
          %397 = vmatpush.msra.mxu0 0.0
          %398 = vmatpush.msra.mxu0 0.0
          %399 = vmatpush.msra.mxu0 0.0
          %400 = vmatpush.msra.mxu0 0.0
          %401 = vmatpush.msra.mxu0 0.0
          %402 = vmatpush.msra.mxu0 0.0
          %403 = vmatpush.msra.mxu0 0.0
          %404 = vmatpush.msra.mxu0 0.0
          %405 = vmatpush.msra.mxu0 0.0
          %406 = vmatpush.msra.mxu0 0.0
          %407 = vmatpush.msra.mxu0 0.0
          %408 = vmatpush.msra.mxu0 0.0
          %409 = vmatpush.msra.mxu0 %v385
          %410 = vmatpush.msra.mxu0 %v383
          %411 = vmatpush.msra.mxu0 %v381
          %412 = vmatpush.msra.mxu0 %v379
          %413 = vmatmul.f32.gmra.mxu0 %v395
          %v414 = vpop.f32.mrf.mxu0
          %v415 = vadd.f32 %v389, %v414
          %416 = vdwg.mxu0
          %417 = vmatpush.msra.mxu0 0.0
          %418 = vmatpush.msra.mxu0 0.0
          %419 = vmatpush.msra.mxu0 0.0
          %420 = vmatpush.msra.mxu0 0.0
          %421 = vmatpush.msra.mxu0 0.0
          %422 = vmatpush.msra.mxu0 0.0
          %423 = vmatpush.msra.mxu0 0.0
          %424 = vmatpush.msra.mxu0 0.0
          %425 = vmatpush.msra.mxu0 0.0
          %426 = vmatpush.msra.mxu0 0.0
          %427 = vmatpush.msra.mxu0 0.0
          %428 = vmatpush.msra.mxu0 0.0
          %429 = vmatpush.msra.mxu0 %v386
          %430 = vmatpush.msra.mxu0 %v384
          %431 = vmatpush.msra.mxu0 %v382
          %432 = vmatpush.msra.mxu0 %v380
          %433 = vmatmul.f32.gmra.mxu0 %v395
          %v434 = vpop.f32.mrf.mxu0
          %v435 = vadd.f32 %v390, %v434
          %436 = vdwg.mxu0
          %v437 = vmax.f32 %v415, 0.0
          %v438 = vmax.f32 %v435, 0.0
          %439 = vst [vmem:[#allocation2] sm:$0xff] %v437
          %440 = vst [vmem:[#allocation2 + $0x8] sm:$0xff] %v438
        $region60: #{tpu_custom_call.1} parent=51 // pred_fallthru
          _
        %v441 = vld [vmem:[#allocation2] sm:$0xff]
        %v442 = vld [vmem:[#allocation2 + $0x8] sm:$0xff]
        %v443 = vld [vmem:[%s327] sm:$0xff]
        %v444 = vld [vmem:[%s327 + $0x8] sm:$0xff]
        %v445 = vld [vmem:[%s327 + $0x10] sm:$0xff]
        %v446 = vld [vmem:[%s327 + $0x18] sm:$0xff]
        %v447 = vld [vmem:[%s327 + $0x20] sm:$0xff]
        %v448 = vld [vmem:[%s327 + $0x28] sm:$0xff]
        %v449 = vld [vmem:[%s327 + $0x30] sm:$0xff]
        %v450 = vld [vmem:[%s327 + $0x38] sm:$0xff]
        %v451 = vld [vmem:[%s327 + $0x40] sm:$0xff]
        %v452 = vld [vmem:[%s327 + $0x48] sm:$0xff]
        %v453 = vld [vmem:[%s327 + $0x50] sm:$0xff]
        %v454 = vld [vmem:[%s327 + $0x58] sm:$0xff]
        %v455 = vld [vmem:[%s327 + $0x60] sm:$0xff]
        %v456 = vld [vmem:[%s327 + $0x68] sm:$0xff]
        %v457 = vld [vmem:[%s327 + $0x70] sm:$0xff]
        %v458 = vld [vmem:[%s327 + $0x78] sm:$0xff]
        %v459 = vld [vmem:[%s327 + $0x80] sm:$0xff]
        %v460 = vld [vmem:[%s327 + $0x88] sm:$0xff]
        %v461 = vld [vmem:[%s327 + $0x90] sm:$0xff]
        %v462 = vld [vmem:[%s327 + $0x98] sm:$0xff]
        %v463 = vld [vmem:[%s327 + $0xa0] sm:$0xff]
        %v464 = vld [vmem:[%s327 + $0xa8] sm:$0xff]
        %v465 = vld [vmem:[%s327 + $0xb0] sm:$0xff]
        %v466 = vld [vmem:[%s327 + $0xb8] sm:$0xff]
        %v467 = vld [vmem:[%s327 + $0xc0] sm:$0xff]
        %v468 = vld [vmem:[%s327 + $0xc8] sm:$0xff]
        %v469 = vld [vmem:[%s327 + $0xd0] sm:$0xff]
        %v470 = vld [vmem:[%s327 + $0xd8] sm:$0xff]
        %v471 = vld [vmem:[%s327 + $0xe0] sm:$0xff]
        %v472 = vld [vmem:[%s327 + $0xe8] sm:$0xff]
        %v473 = vld [vmem:[%s327 + $0xf0] sm:$0xff]
        %v474 = vld [vmem:[%s327 + $0xf8] sm:$0xff]
        %v475 = vld [vmem:[%s327 + $0x100] sm:$0xff]
        %v476 = vld [vmem:[%s327 + $0x108] sm:$0xff]
        %v477 = vld [vmem:[%s327 + $0x110] sm:$0xff]
        %v478 = vld [vmem:[%s327 + $0x118] sm:$0xff]
        %v479 = vld [vmem:[%s327 + $0x120] sm:$0xff]
        %v480 = vld [vmem:[%s327 + $0x128] sm:$0xff]
        %v481 = vld [vmem:[%s327 + $0x130] sm:$0xff]
        %v482 = vld [vmem:[%s327 + $0x138] sm:$0xff]
        %v483 = vld [vmem:[%s327 + $0x140] sm:$0xff]
        %v484 = vld [vmem:[%s327 + $0x148] sm:$0xff]
        %v485 = vld [vmem:[%s327 + $0x150] sm:$0xff]
        %v486 = vld [vmem:[%s327 + $0x158] sm:$0xff]
        %v487 = vld [vmem:[%s327 + $0x160] sm:$0xff]
        %v488 = vld [vmem:[%s327 + $0x168] sm:$0xff]
        %v489 = vld [vmem:[%s327 + $0x170] sm:$0xff]
        %v490 = vld [vmem:[%s327 + $0x178] sm:$0xff]
        %v491 = vld [vmem:[%s327 + $0x180] sm:$0xff]
        %v492 = vld [vmem:[%s327 + $0x188] sm:$0xff]
        %v493 = vld [vmem:[%s327 + $0x190] sm:$0xff]
        %v494 = vld [vmem:[%s327 + $0x198] sm:$0xff]
        %v495 = vld [vmem:[%s327 + $0x1a0] sm:$0xff]
        %v496 = vld [vmem:[%s327 + $0x1a8] sm:$0xff]
        %v497 = vld [vmem:[%s327 + $0x1b0] sm:$0xff]
        %v498 = vld [vmem:[%s327 + $0x1b8] sm:$0xff]
        %v499 = vld [vmem:[%s327 + $0x1c0] sm:$0xff]
        %v500 = vld [vmem:[%s327 + $0x1c8] sm:$0xff]
        %v501 = vld [vmem:[%s327 + $0x1d0] sm:$0xff]
        %v502 = vld [vmem:[%s327 + $0x1d8] sm:$0xff]
        %v503 = vld [vmem:[%s327 + $0x1e0] sm:$0xff]
        %v504 = vld [vmem:[%s327 + $0x1e8] sm:$0xff]
        %v505 = vld [vmem:[%s327 + $0x1f0] sm:$0xff]
        %v506 = vld [vmem:[%s327 + $0x1f8] sm:$0xff]
        %507 = vmatpush.msra.mxu0 %v473
        %508 = vmatpush.msra.mxu0 %v471
        %509 = vmatpush.msra.mxu0 %v469
        %510 = vmatpush.msra.mxu0 %v467
        %511 = vmatpush.msra.mxu0 %v465
        %512 = vmatpush.msra.mxu0 %v463
        %513 = vmatpush.msra.mxu0 %v461
        %514 = vmatpush.msra.mxu0 %v459
        %515 = vmatpush.msra.mxu0 %v457
        %516 = vmatpush.msra.mxu0 %v455
        %517 = vmatpush.msra.mxu0 %v453
        %518 = vmatpush.msra.mxu0 %v451
        %519 = vmatpush.msra.mxu0 %v449
        %520 = vmatpush.msra.mxu0 %v447
        %521 = vmatpush.msra.mxu0 %v445
        %522 = vmatpush.msra.mxu0 %v443
        %523 = vmatmul.f32.gmra.mxu0 %v441
        %v524 = vpop.f32.mrf.mxu0
        %v525 = vadd.f32 0.0, %v524
        %526 = vdwg.mxu0
        %527 = vmatpush.msra.mxu0 %v505
        %528 = vmatpush.msra.mxu0 %v503
        %529 = vmatpush.msra.mxu0 %v501
        %530 = vmatpush.msra.mxu0 %v499
        %531 = vmatpush.msra.mxu0 %v497
        %532 = vmatpush.msra.mxu0 %v495
        %533 = vmatpush.msra.mxu0 %v493
        %534 = vmatpush.msra.mxu0 %v491
        %535 = vmatpush.msra.mxu0 %v489
        %536 = vmatpush.msra.mxu0 %v487
        %537 = vmatpush.msra.mxu0 %v485
        %538 = vmatpush.msra.mxu0 %v483
        %539 = vmatpush.msra.mxu0 %v481
        %540 = vmatpush.msra.mxu0 %v479
        %541 = vmatpush.msra.mxu0 %v477
        %542 = vmatpush.msra.mxu0 %v475
        %543 = vmatmul.f32.gmra.mxu0 %v442
        %v544 = vpop.f32.mrf.mxu0
        %v545 = vadd.f32 %v525, %v544
        %546 = vdwg.mxu0
        %547 = vmatpush.msra.mxu0 %v474
        %548 = vmatpush.msra.mxu0 %v472
        %549 = vmatpush.msra.mxu0 %v470
        %550 = vmatpush.msra.mxu0 %v468
        %551 = vmatpush.msra.mxu0 %v466
        %552 = vmatpush.msra.mxu0 %v464
        %553 = vmatpush.msra.mxu0 %v462
        %554 = vmatpush.msra.mxu0 %v460
        %555 = vmatpush.msra.mxu0 %v458
        %556 = vmatpush.msra.mxu0 %v456
        %557 = vmatpush.msra.mxu0 %v454
        %558 = vmatpush.msra.mxu0 %v452
        %559 = vmatpush.msra.mxu0 %v450
        %560 = vmatpush.msra.mxu0 %v448
        %561 = vmatpush.msra.mxu0 %v446
        %562 = vmatpush.msra.mxu0 %v444
        %563 = vmatmul.f32.gmra.mxu0 %v441
        %v564 = vpop.f32.mrf.mxu0
        %v565 = vadd.f32 0.0, %v564
        %566 = vdwg.mxu0
        %567 = vmatpush.msra.mxu0 %v506
        %568 = vmatpush.msra.mxu0 %v504
        %569 = vmatpush.msra.mxu0 %v502
        %570 = vmatpush.msra.mxu0 %v500
        %571 = vmatpush.msra.mxu0 %v498
        %572 = vmatpush.msra.mxu0 %v496
        %573 = vmatpush.msra.mxu0 %v494
        %574 = vmatpush.msra.mxu0 %v492
        %575 = vmatpush.msra.mxu0 %v490
        %576 = vmatpush.msra.mxu0 %v488
        %577 = vmatpush.msra.mxu0 %v486
        %578 = vmatpush.msra.mxu0 %v484
        %579 = vmatpush.msra.mxu0 %v482
        %580 = vmatpush.msra.mxu0 %v480
        %581 = vmatpush.msra.mxu0 %v478
        %582 = vmatpush.msra.mxu0 %v476
        %583 = vmatmul.f32.gmra.mxu0 %v442
        %v584 = vpop.f32.mrf.mxu0
        %v585 = vadd.f32 %v565, %v584
        %586 = vdwg.mxu0
        %v587 = vrot.slane %v545, 4
        %v588 = vadd.f32 %v545, %v587
        %v589 = vrot.slane %v588, 2
        %v590 = vadd.f32 %v588, %v589
        %v591 = vrot.slane %v590, 1
        %v592 = vadd.f32 %v590, %v591
        %v593 = vrot.slane %v585, 4
        %v594 = vadd.f32 %v585, %v593
        %v595 = vrot.slane %v594, 2
        %v596 = vadd.f32 %v594, %v595
        %v597 = vrot.slane %v596, 1
        %v598 = vadd.f32 %v596, %v597
        %v599 = vrcp.pop 8.0
        %v600 = vmul.f32 8.0, %v599
        %v601 = vsub.f32 1.0, %v600
        %v602 = vmul.f32 %v599, %v601
        %v603 = vadd.f32 %v599, %v602
        %vm604 = vweird.f32 %v599
        %v605 = vsel %vm604, %v599, %v603
        %v606 = vmul.f32 %v592, %v605
        %v607 = vmul.f32 %v598, %v605
        %v608 = vsub.f32 %v545, %v606
        %v609 = vsub.f32 %v585, %v607
        %v610 = vmul.f32 %v608, %v608
        %v611 = vmul.f32 %v609, %v609
        %v612 = vrot.slane %v610, 4
        %v613 = vadd.f32 %v610, %v612
        %v614 = vrot.slane %v613, 2
        %v615 = vadd.f32 %v613, %v614
        %v616 = vrot.slane %v615, 1
        %v617 = vadd.f32 %v615, %v616
        %v618 = vrot.slane %v611, 4
        %v619 = vadd.f32 %v611, %v618
        %v620 = vrot.slane %v619, 2
        %v621 = vadd.f32 %v619, %v620
        %v622 = vrot.slane %v621, 1
        %v623 = vadd.f32 %v621, %v622
        %v624 = vmul.f32 %v617, %v605
        %v625 = vmul.f32 %v623, %v605
        %v626 = vld [vmem:[%s369] sm:$0x3]
        %v627 = vadd.f32 %v624, 1e-05
        %v628 = vadd.f32 %v625, 1e-05
        %v629 = vrsqrt.pop %v627
        %v630 = vmul.f32 %v629, %v627
        %v631 = vmul.f32 %v630, %v629
        %v632 = vmul.f32 0.5, %v631
        %v633 = vsub.f32 1.5, %v632
        %v634 = vmul.f32 %v629, %v633
        %vm635 = vweird.f32 %v627
        %vm636 = vweird.f32 %v629
        %vm637 = vmor %vm635, %vm636
        %v638 = vsel %vm637, %v629, %v634
        %v639 = vrsqrt.pop %v628
        %v640 = vmul.f32 %v639, %v628
        %v641 = vmul.f32 %v640, %v639
        %v642 = vmul.f32 0.5, %v641
        %v643 = vsub.f32 1.5, %v642
        %v644 = vmul.f32 %v639, %v643
        %vm645 = vweird.f32 %v628
        %vm646 = vweird.f32 %v639
        %vm647 = vmor %vm645, %vm646
        %v648 = vsel %vm647, %v639, %v644
        %v651 = vrot.slane %v648, 7
        %vm652 = vcmask 1040384
        %v653 = vsel %vm652, %v638, %v651
        %v655 = vmul.f32 %v626, %v653
        %v656 = vld [vmem:[%s373] sm:$0x3]
        %v658 = vperm.slane %v655, 0
        %v659 = vperm.slane %v655, 1
        %v662 = vmul.f32 %v606, %v658
        %v663 = vmul.f32 %v607, %v659
        %v666 = vrot.slane %v663, 7
        %v667 = vsel %vm652, %v662, %v666
        %v669 = vsub.f32 %v656, %v667
        %v670 = vmul.f32 %v545, %v658
        %v671 = vmul.f32 %v585, %v659
        %v673 = vperm.slane %v669, 0
        %v674 = vperm.slane %v669, 1
        %v677 = vadd.f32 %v670, %v673
        %v678 = vadd.f32 %v671, %v674
        %v679 = vmax.f32 %v677, 0.0
        %v680 = vmax.f32 %v678, 0.0
        %681 = vst [vmem:[#allocation2] sm:$0xff] %v679
        %682 = vst [vmem:[#allocation2 + $0x8] sm:$0xff] %v680
        %p683 = scmp.eq.s32.totalorder %s26, 2
        // Predicated region
        $region61: #{tpu_custom_call.1} parent=51 // pred_check
          %p684 = pneg %p683
        $region62: #{tpu_custom_call.1} parent=51 // pred_check_branch
          %686 = sbr.rel (%p684) target = $region64
        $region63: #{tpu_custom_call.1} parent=51 // pred_region
          %v687 = vld [vmem:[#allocation2] sm:$0xff]
          %v688 = vld [vmem:[#allocation2 + $0x8] sm:$0xff]
          %v689 = vld [vmem:[%s6] sm:$0xff]
          %v690 = vld [vmem:[%s6 + $0x8] sm:$0xff]
          %v691 = vld [vmem:[%s6 + $0x10] sm:$0xff]
          %v692 = vld [vmem:[%s6 + $0x18] sm:$0xff]
          %v693 = vld [vmem:[%s6 + $0x20] sm:$0xff]
          %v694 = vld [vmem:[%s6 + $0x28] sm:$0xff]
          %v695 = vld [vmem:[%s6 + $0x30] sm:$0xff]
          %v696 = vld [vmem:[%s6 + $0x38] sm:$0xff]
          %v697 = vld [vmem:[%s6 + $0x40] sm:$0xff]
          %v698 = vld [vmem:[%s6 + $0x48] sm:$0xff]
          %v699 = vld [vmem:[%s6 + $0x50] sm:$0xff]
          %v700 = vld [vmem:[%s6 + $0x58] sm:$0xff]
          %v701 = vld [vmem:[%s6 + $0x60] sm:$0xff]
          %v702 = vld [vmem:[%s6 + $0x68] sm:$0xff]
          %v703 = vld [vmem:[%s6 + $0x70] sm:$0xff]
          %v704 = vld [vmem:[%s6 + $0x78] sm:$0xff]
          %v705 = vld [vmem:[%s6 + $0x80] sm:$0xff]
          %v706 = vld [vmem:[%s6 + $0x88] sm:$0xff]
          %v707 = vld [vmem:[%s6 + $0x90] sm:$0xff]
          %v708 = vld [vmem:[%s6 + $0x98] sm:$0xff]
          %v709 = vld [vmem:[%s6 + $0xa0] sm:$0xff]
          %v710 = vld [vmem:[%s6 + $0xa8] sm:$0xff]
          %v711 = vld [vmem:[%s6 + $0xb0] sm:$0xff]
          %v712 = vld [vmem:[%s6 + $0xb8] sm:$0xff]
          %v713 = vld [vmem:[%s6 + $0xc0] sm:$0xff]
          %v714 = vld [vmem:[%s6 + $0xc8] sm:$0xff]
          %v715 = vld [vmem:[%s6 + $0xd0] sm:$0xff]
          %v716 = vld [vmem:[%s6 + $0xd8] sm:$0xff]
          %v717 = vld [vmem:[%s6 + $0xe0] sm:$0xff]
          %v718 = vld [vmem:[%s6 + $0xe8] sm:$0xff]
          %v719 = vld [vmem:[%s6 + $0xf0] sm:$0xff]
          %v720 = vld [vmem:[%s6 + $0xf8] sm:$0xff]
          %v721 = vld [vmem:[%s7] sm:$0x1]
          %v723 = vperm.slane %v721, 0
          %725 = vmatpush.msra.mxu0 %v704
          %726 = vmatpush.msra.mxu0 %v703
          %727 = vmatpush.msra.mxu0 %v702
          %728 = vmatpush.msra.mxu0 %v701
          %729 = vmatpush.msra.mxu0 %v700
          %730 = vmatpush.msra.mxu0 %v699
          %731 = vmatpush.msra.mxu0 %v698
          %732 = vmatpush.msra.mxu0 %v697
          %733 = vmatpush.msra.mxu0 %v696
          %734 = vmatpush.msra.mxu0 %v695
          %735 = vmatpush.msra.mxu0 %v694
          %736 = vmatpush.msra.mxu0 %v693
          %737 = vmatpush.msra.mxu0 %v692
          %738 = vmatpush.msra.mxu0 %v691
          %739 = vmatpush.msra.mxu0 %v690
          %740 = vmatpush.msra.mxu0 %v689
          %741 = vmatmul.f32.gmra.mxu0 %v687
          %v742 = vpop.f32.mrf.mxu0
          %v743 = vadd.f32 %v723, %v742
          %744 = vdwg.mxu0
          %745 = vmatpush.msra.mxu0 %v720
          %746 = vmatpush.msra.mxu0 %v719
          %747 = vmatpush.msra.mxu0 %v718
          %748 = vmatpush.msra.mxu0 %v717
          %749 = vmatpush.msra.mxu0 %v716
          %750 = vmatpush.msra.mxu0 %v715
          %751 = vmatpush.msra.mxu0 %v714
          %752 = vmatpush.msra.mxu0 %v713
          %753 = vmatpush.msra.mxu0 %v712
          %754 = vmatpush.msra.mxu0 %v711
          %755 = vmatpush.msra.mxu0 %v710
          %756 = vmatpush.msra.mxu0 %v709
          %757 = vmatpush.msra.mxu0 %v708
          %758 = vmatpush.msra.mxu0 %v707
          %759 = vmatpush.msra.mxu0 %v706
          %760 = vmatpush.msra.mxu0 %v705
          %761 = vmatmul.f32.gmra.mxu0 %v688
          %v762 = vpop.f32.mrf.mxu0
          %v763 = vadd.f32 %v743, %v762
          %764 = vdwg.mxu0
          %vm765 = vcmask 130048
          %766 = vst.msk [vmem:[#allocation6] sm:$0xff] %vm765, %v763
          %v767 = vmul.f32 %v763, 0.5
          %v768 = vmul.f32 %v767, 1.442695
          %v769 = vpow.pop %v768
          %771 = vrot.lane.b32.xlu0 %v769, 112
          %v772 = vpop.permute.xlu0 %771
          %774 = vst.msk [vmem:[#allocation7] sm:$0xff] %vm765, %v772
        $region64: #{tpu_custom_call.1} parent=51 // pred_fallthru
          _
        // Predicated region
        $region65: #{tpu_custom_call.1} parent=51 // pred_check
          %p775 = pneg %p222
        $region66: #{tpu_custom_call.1} parent=51 // pred_check_branch
          %777 = sbr.rel (%p775) target = $region68
        $region67: #{tpu_custom_call.1} parent=51 // pred_region
          %779 = vsyncadd [#allocation5], 0
          %s781 = sshll.u32 [#allocation6], 4
          %s782 = int_to_ptr.vmem [resolvable:$true] %s781
          %s783 = sshll.u32 %s8, 4
          %s784 = int_to_ptr.hbm [resolvable:$true] %s783
          %786 = dma.vmem_to_hbm [thread:$0]  %s782, 128, %s784, [#allocation5]
        $region68: #{tpu_custom_call.1} parent=51 // pred_fallthru
          _
        // Predicated region
        $region69: #{tpu_custom_call.1} parent=51 // pred_check
          %p787 = pneg %p243
        $region70: #{tpu_custom_call.1} parent=51 // pred_check_branch
          %789 = sbr.rel (%p787) target = $region72
        $region71: #{tpu_custom_call.1} parent=51 // pred_region
          %791 = vsyncadd [#allocation8], 0
          %s793 = sshll.u32 [#allocation7], 4
          %s794 = int_to_ptr.vmem [resolvable:$true] %s793
          %s795 = sshll.u32 %s9, 4
          %s796 = int_to_ptr.hbm [resolvable:$true] %s795
          %798 = dma.vmem_to_hbm [thread:$0]  %s794, 128, %s796, [#allocation8]
        $region72: #{tpu_custom_call.1} parent=51 // pred_fallthru
          _
        // Predicated region
        $region73: #{tpu_custom_call.1} parent=51 // pred_check
          %p799 = pneg %p222
        $region74: #{tpu_custom_call.1} parent=51 // pred_check_branch
          %801 = sbr.rel (%p799) target = $region76
        $region75: #{tpu_custom_call.1} parent=51 // pred_region
          %803 = dma.done [#allocation5], 128
        $region76: #{tpu_custom_call.1} parent=51 // pred_fallthru
          _
        // Predicated region
        $region77: #{tpu_custom_call.1} parent=51 // pred_check
          %p804 = pneg %p243
        $region78: #{tpu_custom_call.1} parent=51 // pred_check_branch
          %806 = sbr.rel (%p804) target = $region80
        $region79: #{tpu_custom_call.1} parent=51 // pred_region
          %808 = dma.done [#allocation8], 128
        $region80: #{tpu_custom_call.1} parent=51 // pred_fallthru
          _
      $region52: #{tpu_custom_call.1} parent=5 // pred_fallthru
        _
      %p809 = scmp.le.s32.totalorder 2, %s21
      // Predicated region
      $region81: #{tpu_custom_call.1} parent=5 // pred_check
        %p810 = pneg %p809
      $region82: #{tpu_custom_call.1} parent=5 // pred_check_branch
        %812 = sbr.rel (%p810) target = $region84
      $region83: #{tpu_custom_call.1} parent=5 // pred_region
        %s813 = ssub.s32 %s21, 2
      $region84: #{tpu_custom_call.1} parent=5 // pred_fallthru
        _
    $region6: #{tpu_custom_call.1} parent=1 // loop_footer
      %s25 = sadd.s32 1, %s21
    $region7: #{tpu_custom_call.1} parent=1 // loop_footer_branch
      %20 = sbr.rel target = $region3
    $region8: #{tpu_custom_call.1} parent=1 // loop_exit
      _
    %814 = vsyncpa [#allocation4], 1
    %s815 = scalar_lea.sflag [#allocation4], 1
    %816 = vsyncpa %s815, 1
    %817 = vsyncpa [#allocation5], 1
    %s818 = scalar_lea.sflag [#allocation5], 1
    %819 = vsyncpa %s818, 1
    %820 = vsyncpa [#allocation8], 1

</llo_original>
